<compile_context>
chip_gen: v7x
topology: tpu7x:2x2x1
jax: 0.10.0
libtpu: 0.0.40
codegen_flags: <defaults>
</compile_context>

<pallas_src>
import functools

import jax
import jax.numpy as jnp
from jax.experimental import pallas as pl
from jax.experimental.pallas import tpu as pltpu

_LANES = 128


def _round_up(x: int, m: int) -> int:
    return ((x + m - 1) // m) * m


def _sublanes_for(dtype) -> int:
    # Native sublane tile: 8 rows of 32-bit, 16 of 16-bit (packed dtypes).
    return max(8, 32 // jnp.dtype(dtype).itemsize)


@functools.lru_cache(maxsize=1)
def _tpu_profile():
    """Returns (target_tile_bytes, num_tensorcores, vmem_limit_bytes_or_None)."""
    kind = ""
    try:
        kind = jax.devices()[0].device_kind.lower()
    except Exception:  # defensive: interpret mode / exotic backends
        pass
    if "v5 lite" in kind or "v5lite" in kind or "v5e" in kind:
        # ~0.82 TB/s HBM, 16 MiB default scoped VMEM: 3 MiB blocks (12 MiB live).
        return 3 << 20, 1, None
    if "v6" in kind:
        # ~1.4 TB/s HBM, 32 MiB default scoped VMEM: 4 MiB blocks (16 MiB live).
        return 4 << 20, 1, None
    if "7" in kind:
        # v7x: ~3.2 TB/s per TC, 2 TCs/chip, 64 MiB physical VMEM per TC.
        # 8 MiB blocks amortize the ~0.35 us/step overhead to <10%; 32 MiB live
        # (double-buffered in+out) needs a raised scoped-VMEM limit (48 MiB).
        return 8 << 20, 2, 48 << 20
    # Unknown generation: conservative, fits every chip's default scoped VMEM.
    return 2 << 20, 1, None


def _pbias_kernel(bias_ref, x_ref, o_ref):
    # bias_ref: (1,) f32 scalar in SMEM (already divided by n when training).
    # x_ref / o_ref: (tile_rows, 128) VMEM tiles.
    # f32 accumulate, cast back to the input dtype (free -- kernel is HBM-bound).
    o_ref[...] = (x_ref[...].astype(jnp.float32) + bias_ref[0]).astype(o_ref.dtype)


def _xla_fallback(x, eff_bias):
    # Plain fused XLA add: used for tiny / ragged / non-float inputs, where a
    # Pallas launch is pure overhead or padding would add extra HBM passes.
    if jnp.issubdtype(x.dtype, jnp.floating):
        return (x.astype(jnp.float32) + eff_bias[0]).astype(x.dtype)
    return x + eff_bias[0]


def pbias_forward(x, bias, n=1, training=False, in_place=False,
                  min_kernel_bytes=512 * 1024):
    """Elementwise scalar-bias add matching PBias.forward (any input shape)."""
    eff_bias = (bias / n) if training else bias           # scalar glue in plain JAX
    eff_bias = jnp.asarray(eff_bias, jnp.float32).reshape((1,))

    orig_shape = x.shape
    total = int(x.size)
    itemsize = jnp.dtype(x.dtype).itemsize
    total_bytes = total * itemsize

    # Fast paths: empty / non-float / tiny / ragged inputs -> XLA fused add.
    if total == 0 or not jnp.issubdtype(x.dtype, jnp.floating):
        return _xla_fallback(x, eff_bias)
    sublanes = _sublanes_for(x.dtype)
    chunk = sublanes * _LANES
    if total_bytes < min_kernel_bytes or total % chunk != 0:
        return _xla_fallback(x, eff_bias)

    tile_bytes, num_cores, vmem_limit = _tpu_profile()

    rows = total // _LANES                  # multiple of `sublanes` by construction
    x2d = x.reshape(rows, _LANES)           # pure bitcast reshape (contiguous)
    row_bytes = _LANES * itemsize

    # --- Tile selection -------------------------------------------------------
    # Largest multiple of `sublanes` rows <= generation target bytes per block.
    target_tr = max(sublanes, (tile_bytes // row_bytes) // sublanes * sublanes)
    nblocks = pl.cdiv(rows, target_tr)
    if num_cores > 1:
        # Give every TensorCore work, and >= 2 blocks per core for sizeable
        # inputs so DMA-in / compute / DMA-out overlap within each core.
        if total_bytes >= (4 << 20):
            nblocks = max(nblocks, 2 * num_cores)
        else:
            nblocks = max(nblocks, num_cores)
        nblocks = _round_up(nblocks, num_cores)    # balanced split across cores
    tr = max(sublanes, _round_up(pl.cdiv(rows, nblocks), sublanes))
    grid = (pl.cdiv(rows, tr),)             # ragged last block is masked by Pallas

    if num_cores > 1:
        dim_sem = (getattr(pltpu, "CORE_PARALLEL", "parallel"),)
    else:
        dim_sem = ("parallel",)
    cp_kwargs = dict(dimension_semantics=dim_sem)
    if vmem_limit is not None:
        cp_kwargs["vmem_limit_bytes"] = vmem_limit

    out2d = pl.pallas_call(
        _pbias_kernel,
        out_shape=jax.ShapeDtypeStruct((rows, _LANES), x.dtype),
        grid_spec=pltpu.PrefetchScalarGridSpec(
            num_scalar_prefetch=0,
            grid=grid,
            in_specs=[
                pl.BlockSpec(memory_space=pltpu.SMEM),          # bias scalar
                pl.BlockSpec((tr, _LANES), lambda i: (i, 0)),   # x tile
            ],
            out_specs=pl.BlockSpec((tr, _LANES), lambda i: (i, 0)),
        ),
        compiler_params=pltpu.CompilerParams(**cp_kwargs),
        # Opt-in in-place add: only beneficial when the caller donates x.
        input_output_aliases=({1: 0} if in_place else {}),
    )(eff_bias, x2d)

    return out2d.reshape(orig_shape)


if __name__ == "__main__":
    key = jax.random.PRNGKey(0)
    k1, k2, k3, k4 = jax.random.split(key, 4)

    # PBias.__init__: bias = zeros(1); use a nonzero value so the add is visible.
    bias = jnp.array([0.5], dtype=jnp.float32)
    n = 4

    # 1) Small NCHW f32 (2,4,16,16): below min_kernel_bytes -> XLA fast path;
    #    also force the Pallas path to exercise the kernel at a small aligned shape.
    x = jax.random.normal(k1, (2, 4, 16, 16), dtype=jnp.float32)
    out_eval = pbias_forward(x, bias, n=n, training=False)
    out_train = pbias_forward(x, bias, n=n, training=True)
    out_kern = pbias_forward(x, bias, n=n, training=True, min_kernel_bytes=0)
    jax.block_until_ready((out_eval, out_train, out_kern))
    assert out_eval.shape == x.shape and out_eval.dtype == x.dtype
    assert jnp.allclose(out_eval, x + 0.5, atol=1e-6)
    assert jnp.allclose(out_train, x + 0.5 / n, atol=1e-6)
    assert jnp.allclose(out_kern, x + 0.5 / n, atol=1e-6)

    # 2) Medium f32 activation (4 MiB) -> Pallas kernel, multi-block grid.
    xl = jax.random.normal(k2, (8, 32, 64, 64), dtype=jnp.float32)
    out_l = pbias_forward(xl, bias, n=n, training=True)
    jax.block_until_ready(out_l)
    assert jnp.allclose(out_l, xl + 0.5 / n, atol=1e-6)

    # 3) Aligned bf16 -> Pallas kernel with native (16,128) tiles, f32 accumulate.
    xh = jax.random.normal(k3, (2, 16, 64, 64), dtype=jnp.bfloat16)
    out_h = pbias_forward(xh, bias, n=n, training=False, min_kernel_bytes=0)
    jax.block_until_ready(out_h)
    ref_h = (xh.astype(jnp.float32) + 0.5).astype(jnp.bfloat16)
    assert out_h.shape == xh.shape and out_h.dtype == xh.dtype
    assert jnp.allclose(out_h.astype(jnp.float32), ref_h.astype(jnp.float32), atol=1e-2)

    # 4) Ragged bf16 element count -> XLA fallback (no pad/slice HBM round trips).
    xb = jax.random.normal(k4, (2, 3, 5, 7), dtype=jnp.bfloat16)
    out_b = pbias_forward(xb, bias, n=n, training=False)
    jax.block_until_ready(out_b)
    ref_b = (xb.astype(jnp.float32) + 0.5).astype(jnp.bfloat16)
    assert out_b.shape == xb.shape and out_b.dtype == xb.dtype
    assert jnp.allclose(out_b.astype(jnp.float32), ref_b.astype(jnp.float32), atol=1e-2)

    print("KERNEL_OK")
</pallas_src>

<mosaic_0001>
module attributes {stable_mosaic.version = 11 : i64} {
  func.func @_pbias_kernel(%arg0: i32, %arg1: memref<1xf32, #tpu.memory_space<smem>>, %arg2: memref<16x128xf32, #tpu.memory_space<vmem>>, %arg3: memref<16x128xf32, #tpu.memory_space<vmem>>) attributes {dimension_semantics = [#tpu.dimension_semantics<parallel>], iteration_bounds = array<i64: 1>, scalar_prefetch = 0 : i64, scratch_operands = 0 : i64, tpu.core_type = #tpu.core_type<tc>, window_params = [{transform_indices = @transform_0, window_bounds = array<i64: 1>}, {transform_indices = @transform_1, window_bounds = array<i64: 16, 128>}, {transform_indices = @transform_2, window_bounds = array<i64: 16, 128>}]} {
    %c0 = arith.constant 0 : index
    %c0_0 = arith.constant 0 : index
    %0 = vector.load %arg2[%c0, %c0_0] : memref<16x128xf32, #tpu.memory_space<vmem>>, vector<16x128xf32>
    %c0_1 = arith.constant 0 : index
    %1 = memref.load %arg1[%c0_1] : memref<1xf32, #tpu.memory_space<smem>>
    %2 = vector.broadcast %1 : f32 to vector<16x128xf32>
    %3 = arith.addf %0, %2 : vector<16x128xf32>
    %c0_2 = arith.constant 0 : index
    %c0_3 = arith.constant 0 : index
    %4 = vector.load %arg3[%c0_2, %c0_3] : memref<16x128xf32, #tpu.memory_space<vmem>>, vector<16x128xf32>
    tpu.vector_store %arg3[%c0_2, %c0_3], %3 {strides = array<i32>} : memref<16x128xf32, #tpu.memory_space<vmem>>, vector<16x128xf32>,
    return
  }
  func.func @transform_0(%arg0: i32) -> i32 {
    %c0_i32 = arith.constant 0 : i32
    %c0_i32_0 = arith.constant 0 : i32
    return %c0_i32 : i32
  }
  func.func @transform_1(%arg0: i32) -> (i32, i32) {
    %c0_i32 = arith.constant 0 : i32
    %c0_i32_0 = arith.constant 0 : i32
    return %arg0, %c0_i32 : i32, i32
  }
  func.func @transform_2(%arg0: i32) -> (i32, i32) {
    %c0_i32 = arith.constant 0 : i32
    %c0_i32_0 = arith.constant 0 : i32
    return %arg0, %c0_i32 : i32, i32
  }
}

</mosaic_0001>

<llo_original>
// kernel: tpu_custom_call.1
$region0: #{tpu_custom_call.1}
  #allocation0 [shape = 'u32[]', space=smem, size = 0x4, offset = 0x4, fixed_abs, tag = 'smem constant byte address 0x4 - core index']
  #allocation1 [shape = 'u32[144,128]{1,0:T(1,128)}', space=vmem, size = 0x12000, scoped, tag = 'internal scratch']
  #allocation2 [shape = 'f32[1]{0:T(128)S(6)}', space=smem, size = 0x200, scoped, tag = 'scoped memory for tpu_custom_call.1']
  %s0 = inlined_call_operand.<no memory space> [shape: f32[1], index: 0, kind: input, shape index: {}]
  %s1 = inlined_call_operand.hbm [shape: f32[16,128], index: 1, kind: input, shape index: {}]
  %s2 = inlined_call_operand.hbm [shape: f32[16,128], index: 2, kind: output, shape index: {}]
  %s3 = sld [smem:[#allocation0]]
  $region22: #{tpu_custom_call.1} parent=0
    _
  %s5 = ssub.s32 1, %s3
  %s6 = scalar_select 0, %s5, %s3
  %7 = sst [smem:[#allocation2]] %s0
  $region1: #{tpu_custom_call.1} parent=0
    #allocation3 [shape = 'u8[8192]{0}', space=vmem, size = 0x2000, scoped, tag = 'input window, operand 1, single buffered']
    #allocation4 [shape = 's32[1]{0}', space=sflag, size = 0x4, scoped, tag = 'scoped memory for tpu_custom_call.1']
    #allocation5 [shape = 's32[1]{0}', space=sflag, size = 0x4, scoped, tag = 'scoped memory for tpu_custom_call.1']
    #allocation6 [shape = 'u8[8192]{0}', space=vmem, size = 0x2000, scoped, tag = 'output window, operand 0, single buffered']
    %8 = vsyncpa [#allocation4], 0
    %9 = vsyncpa [#allocation5], 0
    // Predicated region
    $region2: #{tpu_custom_call.1} parent=1 // pred_check
      _
    $region3: #{tpu_custom_call.1} parent=1 // pred_check_branch
      %11 = sbr.rel (0) target = $region5
    $region4: #{tpu_custom_call.1} parent=1 // pred_region
      _
    $region5: #{tpu_custom_call.1} parent=1 // pred_fallthru
      _
    // Predicated region
    $region6: #{tpu_custom_call.1} parent=1 // pred_check
      _
    $region7: #{tpu_custom_call.1} parent=1 // pred_check_branch
      %13 = sbr.rel (0) target = $region9
    $region8: #{tpu_custom_call.1} parent=1 // pred_region
      %s15 = ssub.s32 256, 256
      %16 = vsyncadd [#allocation4], %s15
      %s17 = sshll.u32 [#allocation3], 4
      %s18 = int_to_ptr.vmem [resolvable:$true] %s17
      %23 = dma.hbm_to_vmem [thread:$0]  %s1, 256, %s18, [#allocation4], 128, 128, 8
    $region9: #{tpu_custom_call.1} parent=1 // pred_fallthru
      _
    // Predicated region
    $region10: #{tpu_custom_call.1} parent=1 // pred_check
      _
    $region11: #{tpu_custom_call.1} parent=1 // pred_check_branch
      %25 = sbr.rel (0) target = $region13
    $region12: #{tpu_custom_call.1} parent=1 // pred_region
      %26 = dma.done [#allocation4], 256
    $region13: #{tpu_custom_call.1} parent=1 // pred_fallthru
      _
    %v27 = vld [vmem:[#allocation3] sm:$0xff]
    %v28 = vld [vmem:[#allocation3 + $0x8] sm:$0xff]
    %s29 = sld [smem:[#allocation2]]
    %v30 = vstv %s29
    %v31 = vadd.f32 %v27, %v30
    %v32 = vadd.f32 %v28, %v30
    %33 = vst [vmem:[#allocation6] sm:$0xff] %v31
    %34 = vst [vmem:[#allocation6 + $0x8] sm:$0xff] %v32
    // Predicated region
    $region14: #{tpu_custom_call.1} parent=1 // pred_check
      _
    $region15: #{tpu_custom_call.1} parent=1 // pred_check_branch
      %36 = sbr.rel (0) target = $region17
    $region16: #{tpu_custom_call.1} parent=1 // pred_region
      %s38 = ssub.s32 256, 256
      %39 = vsyncadd [#allocation5], %s38
      %s40 = sshll.u32 [#allocation6], 4
      %s41 = int_to_ptr.vmem [resolvable:$true] %s40
      %46 = dma.vmem_to_hbm [thread:$0]  %s41, 256, %s2, [#allocation5], 128, 128, 8
    $region17: #{tpu_custom_call.1} parent=1 // pred_fallthru
      _
    // Predicated region
    $region18: #{tpu_custom_call.1} parent=1 // pred_check
      _
    $region19: #{tpu_custom_call.1} parent=1 // pred_check_branch
      %48 = sbr.rel (0) target = $region21
    $region20: #{tpu_custom_call.1} parent=1 // pred_region
      %49 = dma.done [#allocation5], 256
    $region21: #{tpu_custom_call.1} parent=1 // pred_fallthru
      _
    %50 = vsyncpa [#allocation4], 1
    %51 = vsyncpa [#allocation5], 1

</llo_original>
